<compile_context>
chip_gen: v6e
topology: v6e:2x2x1
jax: 0.10.0
libtpu: 0.0.40
codegen_flags: <defaults>
</compile_context>

<pallas_src>
import jax
import jax.numpy as jnp
from jax.experimental import pallas as pl
from jax.experimental.pallas import tpu as pltpu


# Static shape metadata only (plain Python ints — creating this costs nothing
# and does not touch JAX / the device).
_RHS_TUPLE = (12, 64)


def _concat_kernel(a_ref, b_ref, o_ref):
    # a_ref: SMEM int32[2]  (the tuple x76)
    # b_ref: SMEM int32[2]  (the constant tuple (12, 64))
    # o_ref: SMEM int32[4]  (the concatenated result)
    o_ref[0] = a_ref[0]
    o_ref[1] = a_ref[1]
    o_ref[2] = b_ref[0]
    o_ref[3] = b_ref[1]


def tuple_add_pallas(x76_arr: jax.Array, rhs_arr: jax.Array) -> jax.Array:
    """Device-side equivalent: concatenate two length-2 int32 vectors in SMEM.

    Validation-only.  Intentionally has no grid, no VMEM specs, and no
    compiler_params — it is four scalar SMEM stores (1D int32[4] pads to a
    trivial 16 bytes); any "tuning" would only add overhead.
    """
    return pl.pallas_call(
        _concat_kernel,
        out_shape=jax.ShapeDtypeStruct((4,), jnp.int32),
        in_specs=[
            pl.BlockSpec(memory_space=pltpu.SMEM),
            pl.BlockSpec(memory_space=pltpu.SMEM),
        ],
        out_specs=pl.BlockSpec(memory_space=pltpu.SMEM),
    )(x76_arr, rhs_arr)


class M:
    """JAX equivalent of the PyTorch module M.

    forward() is pure Python tuple concatenation — zero device work; the
    result is a static (compile-time constant) shape tuple for downstream
    kernels on all TPU generations.
    """

    def forward(self, x76: tuple) -> tuple:
        return tuple(x76) + _RHS_TUPLE

    __call__ = forward


if __name__ == "__main__":
    # Deterministic setup convention (no random tensors are actually needed).
    _ = jax.random.PRNGKey(0)

    x76 = (1, 384)
    expected = (1, 384, 12, 64)

    # Hot path: pure Python (this is the module's forward semantics).
    m = M()
    x77 = m(x76)
    assert x77 == expected, f"got {x77}, expected {expected}"

    # Off-hot-path, one-shot validation of the device-side Pallas concat
    # kernel.  Device arrays are created here (not at import time), the kernel
    # runs once, and readback is a single blocking D2H transfer.
    a = jnp.asarray(x76, dtype=jnp.int32)          # (2,) int32
    rhs = jnp.asarray(_RHS_TUPLE, dtype=jnp.int32)  # (2,) int32
    out = tuple_add_pallas(a, rhs)                  # (4,) int32
    out = jax.block_until_ready(out)
    out_host = tuple(int(v) for v in jax.device_get(out))
    assert out_host == expected, f"pallas got {out_host}, expected {expected}"

    print("KERNEL_OK")
</pallas_src>

<mosaic_0001>
module attributes {stable_mosaic.version = 11 : i64} {
  func.func @_concat_kernel(%arg0: memref<2xi32, #tpu.memory_space<smem>>, %arg1: memref<2xi32, #tpu.memory_space<smem>>, %arg2: memref<4xi32, #tpu.memory_space<smem>>) attributes {dimension_semantics = [], scalar_prefetch = 0 : i64, scratch_operands = 0 : i64, tpu.core_type = #tpu.core_type<tc>} {
    %c0 = arith.constant 0 : index
    %0 = memref.load %arg0[%c0] : memref<2xi32, #tpu.memory_space<smem>>
    %c0_0 = arith.constant 0 : index
    %1 = memref.load %arg2[%c0_0] : memref<4xi32, #tpu.memory_space<smem>>
    memref.store %0, %arg2[%c0_0] : memref<4xi32, #tpu.memory_space<smem>>
    %c1 = arith.constant 1 : index
    %2 = memref.load %arg0[%c1] : memref<2xi32, #tpu.memory_space<smem>>
    %c1_1 = arith.constant 1 : index
    %3 = memref.load %arg2[%c1_1] : memref<4xi32, #tpu.memory_space<smem>>
    memref.store %2, %arg2[%c1_1] : memref<4xi32, #tpu.memory_space<smem>>
    %c0_2 = arith.constant 0 : index
    %4 = memref.load %arg1[%c0_2] : memref<2xi32, #tpu.memory_space<smem>>
    %c2 = arith.constant 2 : index
    %5 = memref.load %arg2[%c2] : memref<4xi32, #tpu.memory_space<smem>>
    memref.store %4, %arg2[%c2] : memref<4xi32, #tpu.memory_space<smem>>
    %c1_3 = arith.constant 1 : index
    %6 = memref.load %arg1[%c1_3] : memref<2xi32, #tpu.memory_space<smem>>
    %c3 = arith.constant 3 : index
    %7 = memref.load %arg2[%c3] : memref<4xi32, #tpu.memory_space<smem>>
    memref.store %6, %arg2[%c3] : memref<4xi32, #tpu.memory_space<smem>>
    return
  }
}

</mosaic_0001>

<llo_original>
// kernel: tpu_custom_call.1
$region0: #{tpu_custom_call.1}
  #allocation0 [shape = 'u32[]', space=smem, size = 0x4, offset = 0x4, fixed_abs, tag = 'smem constant byte address 0x4 - core index']
  #allocation1 [shape = 'u32[144,128]{1,0:T(1,128)}', space=vmem, size = 0x12000, scoped, tag = 'internal scratch']
  %s0 = inlined_call_operand.hbm [shape: s32[2], index: 0, kind: input, shape index: {}]
  %s1 = inlined_call_operand.vmem [shape: s32[2], index: 1, kind: input, shape index: {}]
  %s2 = inlined_call_operand.hbm [shape: s32[4], index: 2, kind: output, shape index: {}]
  %s3 = sld [smem:[#allocation0]]
  $region26: #{tpu_custom_call.1} parent=0
    _
  %s5 = ssub.s32 1, %s3
  %s6 = scalar_select 0, %s5, %s3
  $region1: #{tpu_custom_call.1} parent=0
    #allocation2 [shape = 'u8[512]{0}', space=smem, size = 0x200, scoped, tag = 'input window, operand 0, single buffered']
    #allocation3 [shape = 's32[1]{0}', space=sflag, size = 0x4, scoped, tag = 'scoped memory for tpu_custom_call.1']
    #allocation4 [shape = 's32[1]{0}', space=sflag, size = 0x4, scoped, tag = 'scoped memory for tpu_custom_call.1']
    #allocation5 [shape = 's32[1]{0}', space=sflag, size = 0x4, scoped, tag = 'scoped memory for tpu_custom_call.1']
    #allocation6 [shape = 'u8[512]{0}', space=smem, size = 0x200, scoped, tag = 'input window, operand 1, single buffered']
    #allocation7 [shape = 'u8[512]{0}', space=smem, size = 0x200, scoped, tag = 'output window, operand 0, single buffered']
    %7 = vsyncpa [#allocation3], 0
    %8 = vsyncpa [#allocation5], 0
    %9 = vsyncpa [#allocation4], 0
    // Predicated region
    $region2: #{tpu_custom_call.1} parent=1 // pred_check
      _
    $region3: #{tpu_custom_call.1} parent=1 // pred_check_branch
      %11 = sbr.rel (0) target = $region5
    $region4: #{tpu_custom_call.1} parent=1 // pred_region
      %s13 = ssub.s32 16, 16
      %14 = vsyncadd [#allocation3], %s13
      %17 = dma.hbm_to_smem %s0, 16, [#allocation2], [#allocation3]
    $region5: #{tpu_custom_call.1} parent=1 // pred_fallthru
      _
    // Predicated region
    $region6: #{tpu_custom_call.1} parent=1 // pred_check
      _
    $region7: #{tpu_custom_call.1} parent=1 // pred_check_branch
      %19 = sbr.rel (0) target = $region9
    $region8: #{tpu_custom_call.1} parent=1 // pred_region
      %s21 = ssub.s32 16, 16
      %22 = vsyncadd [#allocation5], %s21
      %s24 = sshll.u32 %s1, 4
      %s25 = int_to_ptr.vmem [resolvable:$true] %s24
      %27 = dma.vmem_to_smem %s25, 16, [#allocation6], [#allocation5]
    $region9: #{tpu_custom_call.1} parent=1 // pred_fallthru
      _
    // Predicated region
    $region10: #{tpu_custom_call.1} parent=1 // pred_check
      _
    $region11: #{tpu_custom_call.1} parent=1 // pred_check_branch
      %29 = sbr.rel (0) target = $region13
    $region12: #{tpu_custom_call.1} parent=1 // pred_region
      %30 = dma.done [#allocation3], 16
    $region13: #{tpu_custom_call.1} parent=1 // pred_fallthru
      _
    // Predicated region
    $region14: #{tpu_custom_call.1} parent=1 // pred_check
      _
    $region15: #{tpu_custom_call.1} parent=1 // pred_check_branch
      %32 = sbr.rel (0) target = $region17
    $region16: #{tpu_custom_call.1} parent=1 // pred_region
      %33 = dma.done [#allocation5], 16
    $region17: #{tpu_custom_call.1} parent=1 // pred_fallthru
      _
    %34 = sfence
    %s35 = sld [smem:[#allocation2]]
    %s36 = scalar_lea.smem [#allocation7], 0
    %37 = sst [smem:[%s36]] %s35
    %s38 = sld [smem:[#allocation2 + $0x1]]
    %s39 = scalar_lea.smem [#allocation7], 1
    %40 = sst [smem:[%s39]] %s38
    %s41 = sld [smem:[#allocation6]]
    %s42 = scalar_lea.smem [#allocation7], 2
    %43 = sst [smem:[%s42]] %s41
    %s44 = sld [smem:[#allocation6 + $0x1]]
    %s45 = scalar_lea.smem [#allocation7], 3
    %46 = sst [smem:[%s45]] %s44
    // Predicated region
    $region18: #{tpu_custom_call.1} parent=1 // pred_check
      _
    $region19: #{tpu_custom_call.1} parent=1 // pred_check_branch
      %48 = sbr.rel (0) target = $region21
    $region20: #{tpu_custom_call.1} parent=1 // pred_region
      %s50 = ssub.s32 16, 16
      %51 = vsyncadd [#allocation4], %s50
      %54 = dma.smem_to_hbm [#allocation7], 16, %s2, [#allocation4]
    $region21: #{tpu_custom_call.1} parent=1 // pred_fallthru
      _
    // Predicated region
    $region22: #{tpu_custom_call.1} parent=1 // pred_check
      _
    $region23: #{tpu_custom_call.1} parent=1 // pred_check_branch
      %56 = sbr.rel (0) target = $region25
    $region24: #{tpu_custom_call.1} parent=1 // pred_region
      %57 = dma.done [#allocation4], 16
    $region25: #{tpu_custom_call.1} parent=1 // pred_fallthru
      _
    %58 = sfence
    %59 = vsyncpa [#allocation3], 1
    %60 = vsyncpa [#allocation4], 1
    %61 = vsyncpa [#allocation5], 1

</llo_original>
